<compile_context>
chip_gen: v5e
topology: v5e:2x2
jax: 0.10.0
libtpu: 0.0.40
codegen_flags: <defaults>
</compile_context>

<pallas_src>
import functools

import jax
import jax.numpy as jnp
from jax.experimental import pallas as pl
from jax.experimental.pallas import tpu as pltpu


def _delta_kernel(img1_ref, img2_ref, out_ref, *, thresh, inv_scale, num_channels):
    """img refs: (1, C, tF) blocks; out_ref: (1, 1, tF)."""
    acc = None
    for c in range(num_channels):       # unrolled: live f32 temporaries stay O(tF)
        a = img1_ref[:, c, :].astype(jnp.float32)
        b = img2_ref[:, c, :].astype(jnp.float32)
        d = a - b
        acc = d * d if acc is None else acc + d * d

    if thresh is None:
        out = jnp.sqrt(acc)
        if inv_scale != 1.0:
            out = out * jnp.float32(inv_scale)          # single final normalize
        out_ref[:, 0, :] = out.astype(out_ref.dtype)
    elif thresh >= 0:
        # sqrt(acc) * inv_scale > thresh  <=>  acc > (thresh / inv_scale)^2
        t = jnp.float32(float(thresh) / float(inv_scale))
        out_ref[:, 0, :] = (acc > t * t).astype(out_ref.dtype)
    else:
        # Negative threshold: trivially all-true; keep exact math for safety.
        out = jnp.sqrt(acc) * jnp.float32(inv_scale)
        out_ref[:, 0, :] = (out > jnp.float32(thresh)).astype(out_ref.dtype)


_SUBLANE = {1: 32, 2: 16, 4: 8}  # sublane tiling per itemsize


def _choose_tf(F, C, itemsize, B, target_bytes=4 << 20, min_steps=8):
    """Pick the flattened-axis tile size.

    Targets ~`target_bytes` of VMEM per (double-buffered) input buffer,
    counted with sublane padding of the C axis, keeps the tile a multiple of
    128 lanes, and guarantees enough grid steps for pipelining / dual-TC use.
    """
    sub = _SUBLANE.get(itemsize, 8)
    padded_c = -(-C // sub) * sub
    tf = target_bytes // max(1, padded_c * itemsize)
    tf = max(1024, (tf // 1024) * 1024)          # multiple of 8*128
    tf = min(tf, 256 * 1024)
    if tf >= F:
        return F                                  # one full-extent block (always legal)
    # Ensure a few grid steps so small-batch inputs still pipeline / shard.
    while B * pl.cdiv(F, tf) < min_steps and tf > 1024:
        tf = max(1024, (tf // 2 // 128) * 128)
    return tf


def delta_images(img1, img2, thresh=0.025, out_dtype=jnp.float32, block_elems=None):
    """Pallas equivalent of DeltaImages.forward(img1, img2) -> [B, 1, 1, H, W].

    img1, img2: [B, C, H, W] uint8, float32, bfloat16 or float16.
    block_elems (optional): override flattened tile size (multiple of 128 or == H*W).
    """
    assert img1.shape == img2.shape, (img1.shape, img2.shape)
    B, C, H, W = img1.shape
    F = H * W
    # NOTE: PyTorch's `video.shape[1] == 1` zero-branch can never trigger here:
    # we always stack exactly two frames.

    is_uint8 = (img1.dtype == jnp.dtype(jnp.uint8)) and (img2.dtype == jnp.dtype(jnp.uint8))
    if is_uint8:
        inv_scale = 1.0 / 255.0
    else:
        inv_scale = 1.0
        native = (jnp.dtype(jnp.float32), jnp.dtype(jnp.bfloat16), jnp.dtype(jnp.float16))
        if img1.dtype != img2.dtype or img1.dtype not in native:
            img1 = img1.astype(jnp.float32)
            img2 = img2.astype(jnp.float32)
        # bf16/f16 stay in their native 2-byte dtype: half the input HBM traffic.

    # Free, contiguous reshapes -> lane-dense flattened spatial axis.
    a = img1.reshape(B, C, F)
    b = img2.reshape(B, C, F)

    itemsize = jnp.dtype(a.dtype).itemsize
    tF = block_elems if block_elems is not None else _choose_tf(F, C, itemsize, B)
    grid = (B, pl.cdiv(F, tF))

    kernel = functools.partial(
        _delta_kernel, thresh=thresh, inv_scale=inv_scale, num_channels=C)

    flat = pl.pallas_call(
        kernel,
        out_shape=jax.ShapeDtypeStruct((B, 1, F), out_dtype),
        grid_spec=pltpu.PrefetchScalarGridSpec(
            num_scalar_prefetch=0,
            grid=grid,
            in_specs=[
                pl.BlockSpec((1, C, tF), lambda i, j: (i, 0, j)),
                pl.BlockSpec((1, C, tF), lambda i, j: (i, 0, j)),
            ],
            out_specs=pl.BlockSpec((1, 1, tF), lambda i, j: (i, 0, j)),
        ),
        compiler_params=pltpu.CompilerParams(
            dimension_semantics=("parallel", "parallel"),
            vmem_limit_bytes=32 << 20,
        ),
    )(a, b)

    # Free metadata reshape back to the PyTorch output rank.
    return flat.reshape(B, 1, 1, H, W)


def delta_images_ref(img1, img2, thresh=0.025):
    """Pure-JAX reference mirroring the PyTorch module exactly."""
    video = jnp.stack([img1, img2], axis=1)  # [B, 2, C, H, W]
    if video.dtype == jnp.uint8:
        video = video.astype(jnp.float32) / 255.0
    video = video.astype(jnp.float32)
    delta = jnp.sqrt(
        jnp.sum((video[:, :-1] - video[:, 1:]) ** 2, axis=-3, keepdims=True))
    if thresh is not None:
        return (delta > thresh).astype(jnp.float32)
    return delta


def _check_thresholded(out, img1, img2, thresh, tol=1e-5):
    """Thresholded 0/1 outputs may differ from the reference only for pixels
    whose delta sits within float-rounding distance of the threshold."""
    ref = delta_images_ref(img1, img2, thresh)
    delta = delta_images_ref(img1, img2, None)
    mismatch = out != ref
    boundary = jnp.abs(delta - jnp.float32(thresh)) <= tol * max(1.0, abs(thresh))
    assert bool(jnp.all(jnp.logical_or(~mismatch, boundary))), "threshold path mismatch"


if __name__ == "__main__":
    key = jax.random.PRNGKey(0)
    k1, k2, k3, k4 = jax.random.split(key, 4)

    # --- float32 inputs, thresholded path (B=2, C=4, 16x16) ---
    B, C, H, W = 2, 4, 16, 16
    img1 = jax.random.uniform(k1, (B, C, H, W), dtype=jnp.float32)
    img2 = img1 + 0.02 * jax.random.normal(k2, (B, C, H, W), dtype=jnp.float32)

    out = jax.block_until_ready(delta_images(img1, img2))
    assert out.shape == (B, 1, 1, H, W), out.shape
    assert out.dtype == jnp.float32
    _check_thresholded(out, img1, img2, 0.025)

    # --- float32 inputs, thresh=None (raw delta) path ---
    out_d = jax.block_until_ready(delta_images(img1, img2, thresh=None))
    ref_d = delta_images_ref(img1, img2, thresh=None)
    assert jnp.allclose(out_d, ref_d, atol=1e-6), "thresh=None path mismatch"

    # --- uint8 inputs, /255 folded into the integer-domain threshold ---
    Bu, Cu, Hu, Wu = 2, 3, 32, 24
    u1 = jax.random.randint(k3, (Bu, Cu, Hu, Wu), 0, 256, dtype=jnp.int32).astype(jnp.uint8)
    u2 = jax.random.randint(k4, (Bu, Cu, Hu, Wu), 0, 256, dtype=jnp.int32).astype(jnp.uint8)
    out_u = jax.block_until_ready(delta_images(u1, u2))
    assert out_u.shape == (Bu, 1, 1, Hu, Wu), out_u.shape
    _check_thresholded(out_u, u1, u2, 0.025)

    # --- small forced tile: exercises the cdiv overhang / masked final block ---
    Bo, Co, Ho, Wo = 1, 3, 36, 36            # F = 1296, tF = 256 -> 6 blocks, 16-elem overhang
    o1 = jax.random.uniform(k1, (Bo, Co, Ho, Wo), dtype=jnp.float32)
    o2 = o1 + 0.02 * jax.random.normal(k2, (Bo, Co, Ho, Wo), dtype=jnp.float32)
    out_o = jax.block_until_ready(delta_images(o1, o2, thresh=None, block_elems=256))
    ref_o = delta_images_ref(o1, o2, thresh=None)
    assert jnp.allclose(out_o, ref_o, atol=1e-6), "overhang block mismatch"

    print("KERNEL_OK")
</pallas_src>

<mosaic_0001>
module attributes {stable_mosaic.version = 11 : i64} {
  func.func @_delta_kernel(%arg0: i32, %arg1: i32, %arg2: memref<1x4x256xf32, #tpu.memory_space<vmem>>, %arg3: memref<1x4x256xf32, #tpu.memory_space<vmem>>, %arg4: memref<1x1x256xf32, #tpu.memory_space<vmem>>) attributes {dimension_semantics = [#tpu.dimension_semantics<parallel>, #tpu.dimension_semantics<parallel>], iteration_bounds = array<i64: 2, 1>, scalar_prefetch = 0 : i64, scratch_operands = 0 : i64, tpu.core_type = #tpu.core_type<tc>, window_params = [{transform_indices = @transform_0, window_bounds = array<i64: 1, 4, 256>}, {transform_indices = @transform_1, window_bounds = array<i64: 1, 4, 256>}, {transform_indices = @transform_2, window_bounds = array<i64: 1, 1, 256>}]} {
    %c0 = arith.constant 0 : index
    %c0_0 = arith.constant 0 : index
    %c0_1 = arith.constant 0 : index
    %0 = vector.load %arg2[%c0, %c0_0, %c0_1] : memref<1x4x256xf32, #tpu.memory_space<vmem>>, vector<1x1x256xf32>
    %1 = vector.shape_cast %0 : vector<1x1x256xf32> to vector<1x256xf32>
    %c0_2 = arith.constant 0 : index
    %c0_3 = arith.constant 0 : index
    %c0_4 = arith.constant 0 : index
    %2 = vector.load %arg3[%c0_2, %c0_3, %c0_4] : memref<1x4x256xf32, #tpu.memory_space<vmem>>, vector<1x1x256xf32>
    %3 = vector.shape_cast %2 : vector<1x1x256xf32> to vector<1x256xf32>
    %4 = arith.subf %1, %3 : vector<1x256xf32>
    %5 = arith.mulf %4, %4 : vector<1x256xf32>
    %c0_5 = arith.constant 0 : index
    %c1 = arith.constant 1 : index
    %c0_6 = arith.constant 0 : index
    %6 = vector.load %arg2[%c0_5, %c1, %c0_6] : memref<1x4x256xf32, #tpu.memory_space<vmem>>, vector<1x1x256xf32>
    %7 = vector.shape_cast %6 : vector<1x1x256xf32> to vector<1x256xf32>
    %c0_7 = arith.constant 0 : index
    %c1_8 = arith.constant 1 : index
    %c0_9 = arith.constant 0 : index
    %8 = vector.load %arg3[%c0_7, %c1_8, %c0_9] : memref<1x4x256xf32, #tpu.memory_space<vmem>>, vector<1x1x256xf32>
    %9 = vector.shape_cast %8 : vector<1x1x256xf32> to vector<1x256xf32>
    %10 = arith.subf %7, %9 : vector<1x256xf32>
    %11 = arith.mulf %10, %10 : vector<1x256xf32>
    %12 = arith.addf %5, %11 : vector<1x256xf32>
    %c0_10 = arith.constant 0 : index
    %c2 = arith.constant 2 : index
    %c0_11 = arith.constant 0 : index
    %13 = vector.load %arg2[%c0_10, %c2, %c0_11] : memref<1x4x256xf32, #tpu.memory_space<vmem>>, vector<1x1x256xf32>
    %14 = vector.shape_cast %13 : vector<1x1x256xf32> to vector<1x256xf32>
    %c0_12 = arith.constant 0 : index
    %c2_13 = arith.constant 2 : index
    %c0_14 = arith.constant 0 : index
    %15 = vector.load %arg3[%c0_12, %c2_13, %c0_14] : memref<1x4x256xf32, #tpu.memory_space<vmem>>, vector<1x1x256xf32>
    %16 = vector.shape_cast %15 : vector<1x1x256xf32> to vector<1x256xf32>
    %17 = arith.subf %14, %16 : vector<1x256xf32>
    %18 = arith.mulf %17, %17 : vector<1x256xf32>
    %19 = arith.addf %12, %18 : vector<1x256xf32>
    %c0_15 = arith.constant 0 : index
    %c3 = arith.constant 3 : index
    %c0_16 = arith.constant 0 : index
    %20 = vector.load %arg2[%c0_15, %c3, %c0_16] : memref<1x4x256xf32, #tpu.memory_space<vmem>>, vector<1x1x256xf32>
    %21 = vector.shape_cast %20 : vector<1x1x256xf32> to vector<1x256xf32>
    %c0_17 = arith.constant 0 : index
    %c3_18 = arith.constant 3 : index
    %c0_19 = arith.constant 0 : index
    %22 = vector.load %arg3[%c0_17, %c3_18, %c0_19] : memref<1x4x256xf32, #tpu.memory_space<vmem>>, vector<1x1x256xf32>
    %23 = vector.shape_cast %22 : vector<1x1x256xf32> to vector<1x256xf32>
    %24 = arith.subf %21, %23 : vector<1x256xf32>
    %25 = arith.mulf %24, %24 : vector<1x256xf32>
    %26 = arith.addf %19, %25 : vector<1x256xf32>
    %cst = arith.constant 2.500000e-02 : f32
    %cst_20 = arith.constant 2.500000e-02 : f32
    %27 = arith.mulf %cst, %cst_20 : f32
    %28 = vector.broadcast %27 : f32 to vector<1x256xf32>
    %29 = arith.cmpf ogt, %26, %28 : vector<1x256xf32>
    %30 = arith.extui %29 : vector<1x256xi1> to vector<1x256xi32>
    %31 = arith.sitofp %30 : vector<1x256xi32> to vector<1x256xf32>
    %c0_21 = arith.constant 0 : index
    %c0_22 = arith.constant 0 : index
    %c0_23 = arith.constant 0 : index
    %32 = vector.load %arg4[%c0_21, %c0_22, %c0_23] : memref<1x1x256xf32, #tpu.memory_space<vmem>>, vector<1x1x256xf32>
    %33 = vector.shape_cast %32 : vector<1x1x256xf32> to vector<1x256xf32>
    %34 = vector.shape_cast %31 : vector<1x256xf32> to vector<1x1x256xf32>
    tpu.vector_store %arg4[%c0_21, %c0_22, %c0_23], %34 {strides = array<i32>} : memref<1x1x256xf32, #tpu.memory_space<vmem>>, vector<1x1x256xf32>,
    return
  }
  func.func @transform_0(%arg0: i32, %arg1: i32) -> (i32, i32, i32) {
    %c0_i32 = arith.constant 0 : i32
    %c0_i32_0 = arith.constant 0 : i32
    return %arg0, %c0_i32, %arg1 : i32, i32, i32
  }
  func.func @transform_1(%arg0: i32, %arg1: i32) -> (i32, i32, i32) {
    %c0_i32 = arith.constant 0 : i32
    %c0_i32_0 = arith.constant 0 : i32
    return %arg0, %c0_i32, %arg1 : i32, i32, i32
  }
  func.func @transform_2(%arg0: i32, %arg1: i32) -> (i32, i32, i32) {
    %c0_i32 = arith.constant 0 : i32
    %c0_i32_0 = arith.constant 0 : i32
    return %arg0, %c0_i32, %arg1 : i32, i32, i32
  }
}

</mosaic_0001>

<llo_original>
// kernel: tpu_custom_call.1
$region0: #{tpu_custom_call.1}
  #allocation0 [shape = 'u32[]', space=smem, size = 0x4, offset = 0x4, fixed_abs, tag = 'smem constant byte address 0x4 - core index']
  #allocation1 [shape = 'u32[72,128]{1,0:T(1,128)}', space=vmem, size = 0x9000, scoped, tag = 'internal scratch']
  %s0 = inlined_call_operand.hbm [shape: f32[2,4,256], index: 0, kind: input, shape index: {}]
  %s1 = inlined_call_operand.hbm [shape: f32[2,4,256], index: 1, kind: input, shape index: {}]
  %s2 = inlined_call_operand.hbm [shape: f32[2,1,256], index: 2, kind: output, shape index: {}]
  %s3 = sld [smem:[#allocation0]]
  $region49: #{tpu_custom_call.1} parent=0
    _
  %s5 = ssub.s32 1, %s3
  %s6 = scalar_select 0, %s5, %s3
  $region1: #{tpu_custom_call.1} parent=0
    #allocation2 [shape = 'u8[8192]{0}', space=vmem, size = 0x2000, scoped, tag = 'input window, operand 0']
    #allocation3 [shape = 's32[2]{0}', space=sflag, size = 0x8, scoped, tag = 'scoped memory for tpu_custom_call.1']
    #allocation4 [shape = 's32[2]{0}', space=sflag, size = 0x8, scoped, tag = 'scoped memory for tpu_custom_call.1']
    #allocation5 [shape = 'u8[8192]{0}', space=vmem, size = 0x2000, scoped, tag = 'input window, operand 1']
    #allocation6 [shape = 's32[2]{0}', space=sflag, size = 0x8, scoped, tag = 'scoped memory for tpu_custom_call.1']
    #allocation7 [shape = 'u8[2048]{0}', space=vmem, size = 0x800, scoped, tag = 'output window, operand 0']
    %7 = vsyncpa [#allocation3], 0
    %s8 = scalar_lea.sflag [#allocation3], 1
    %9 = vsyncpa %s8, 0
    %10 = vsyncpa [#allocation6], 0
    %s11 = scalar_lea.sflag [#allocation6], 1
    %12 = vsyncpa %s11, 0
    %13 = vsyncpa [#allocation4], 0
    %s14 = scalar_lea.sflag [#allocation4], 1
    %15 = vsyncpa %s14, 0
    loop: start=0, step=1, limit=4
    $region2: #{tpu_custom_call.1} parent=1 // loop_pre_header
      _
    $region3: #{tpu_custom_call.1} parent=1 // loop_header
      %s17 = sphi 0, %s21
      %p18 = scmp.ge.s32.totalorder %s17, 4
      %s24 = sphi 0, %s36
      %s25 = sphi 0, %s32
      %s26 = sphi 0, %s24
      %s27 = sphi 0, %s25
      %s28 = sphi 0, %s26
      %s29 = sphi 0, %s27
      %s41 = sphi 0, %s43
      %s44 = sphi 0, %s41
      %s45 = sphi 0, %s44
      %s61 = sphi 0, %s45
      %s69 = sphi 0, %s71
      %s72 = sphi 0, %s69
      %s73 = sphi 0, %s72
      %s89 = sphi 0, %s73
      %s97 = sphi 0, %s99
      %s100 = sphi 0, %s97
      %s101 = sphi 0, %s100
      %s117 = sphi 0, %s101
    $region4: #{tpu_custom_call.1} parent=1 // loop_header_branch
      %20 = sbr.rel (%p18) target = $region8
    $region5: #{tpu_custom_call.1} parent=1 // loop_body
      %s22 = ssub.s32 %s17, 1
      %s23 = ssub.s32 %s17, 2
      %s30 = sadd.s32 1, %s25
      %p31 = scmp.ge.s32.totalorder %s30, 1
      %s32 = scalar_select %p31, 0, %s30
      %s33 = sadd.s32 1, %s24
      %s34 = scalar_select %p31, %s33, %s24
      %p35 = scmp.ge.s32.totalorder %s34, 2
      %s36 = scalar_select %p35, 0, %s34
      %s37 = ssub.s32 %s24, %s36
      %s38 = ssub.s32 %s25, %s32
      %s39 = sor.u32 %s37, %s38
      %p40 = scmp.eq.s32.totalorder %s39, 0
      %s42 = sadd.s32 %s41, 1
      %s43 = scalar_select %p40, %s41, %s42
      %p46 = pneg %p40
      %p47 = scmp.eq.s32.totalorder %s17, 1
      %p48 = por %p46, %p47
      %p49 = scmp.ne.s32.totalorder %s41, %s44
      %p50 = scmp.eq.s32.totalorder %s17, 0
      %p51 = por %p49, %p50
      %p52 = scmp.ne.s32.totalorder %s41, %s44
      %p53 = scmp.eq.s32.totalorder %s22, 1
      %p54 = por %p52, %p53
      %p55 = scmp.ne.s32.totalorder %s44, %s45
      %p56 = scmp.eq.s32.totalorder %s22, 0
      %p57 = por %p55, %p56
      %p58 = scmp.ne.s32.totalorder %s44, %s45
      %p59 = scmp.eq.s32.totalorder %s23, 1
      %p60 = por %p58, %p59
      %p62 = scmp.ne.s32.totalorder %s45, %s61
      %p63 = scmp.eq.s32.totalorder %s23, 0
      %p64 = por %p62, %p63
      %s65 = ssub.s32 %s24, %s36
      %s66 = ssub.s32 %s25, %s32
      %s67 = sor.u32 %s65, %s66
      %p68 = scmp.eq.s32.totalorder %s67, 0
      %s70 = sadd.s32 %s69, 1
      %s71 = scalar_select %p68, %s69, %s70
      %p74 = pneg %p68
      %p75 = scmp.eq.s32.totalorder %s17, 1
      %p76 = por %p74, %p75
      %p77 = scmp.ne.s32.totalorder %s69, %s72
      %p78 = scmp.eq.s32.totalorder %s17, 0
      %p79 = por %p77, %p78
      %p80 = scmp.ne.s32.totalorder %s69, %s72
      %p81 = scmp.eq.s32.totalorder %s22, 1
      %p82 = por %p80, %p81
      %p83 = scmp.ne.s32.totalorder %s72, %s73
      %p84 = scmp.eq.s32.totalorder %s22, 0
      %p85 = por %p83, %p84
      %p86 = scmp.ne.s32.totalorder %s72, %s73
      %p87 = scmp.eq.s32.totalorder %s23, 1
      %p88 = por %p86, %p87
      %p90 = scmp.ne.s32.totalorder %s73, %s89
      %p91 = scmp.eq.s32.totalorder %s23, 0
      %p92 = por %p90, %p91
      %s93 = ssub.s32 %s24, %s36
      %s94 = ssub.s32 %s25, %s32
      %s95 = sor.u32 %s93, %s94
      %p96 = scmp.eq.s32.totalorder %s95, 0
      %s98 = sadd.s32 %s97, 1
      %s99 = scalar_select %p96, %s97, %s98
      %p102 = pneg %p96
      %p103 = scmp.eq.s32.totalorder %s17, 1
      %p104 = por %p102, %p103
      %p105 = scmp.ne.s32.totalorder %s97, %s100
      %p106 = scmp.eq.s32.totalorder %s17, 0
      %p107 = por %p105, %p106
      %p108 = scmp.ne.s32.totalorder %s97, %s100
      %p109 = scmp.eq.s32.totalorder %s22, 1
      %p110 = por %p108, %p109
      %p111 = scmp.ne.s32.totalorder %s100, %s101
      %p112 = scmp.eq.s32.totalorder %s22, 0
      %p113 = por %p111, %p112
      %p114 = scmp.ne.s32.totalorder %s100, %s101
      %p115 = scmp.eq.s32.totalorder %s23, 1
      %p116 = por %p114, %p115
      %p118 = scmp.ne.s32.totalorder %s101, %s117
      %p119 = scmp.eq.s32.totalorder %s23, 0
      %p120 = por %p118, %p119
      %p121 = scmp.le.s32.totalorder 1, %s17
      %p122 = scmp.lt.s32.totalorder %s17, 3
      %p123 = pnand %p121, %p122
      %p124 = pneg %p123
      // Predicated region
      $region9: #{tpu_custom_call.1} parent=5 // pred_check
        _
      $region10: #{tpu_custom_call.1} parent=5 // pred_check_branch
        %126 = sbr.rel (%p123) target = $region12
      $region11: #{tpu_custom_call.1} parent=5 // pred_region
        %s127 = ssub.s32 %s17, 1
      $region12: #{tpu_custom_call.1} parent=5 // pred_fallthru
        _
      %p128 = scmp.lt.s32.totalorder %s17, 2
      // Predicated region
      $region13: #{tpu_custom_call.1} parent=5 // pred_check
        %p129 = pneg %p128
      $region14: #{tpu_custom_call.1} parent=5 // pred_check_branch
        %131 = sbr.rel (%p129) target = $region16
      $region15: #{tpu_custom_call.1} parent=5 // pred_region
        // Predicated region
        $region17: #{tpu_custom_call.1} parent=15 // pred_check
          %p132 = pneg %p51
        $region18: #{tpu_custom_call.1} parent=15 // pred_check_branch
          %134 = sbr.rel (%p132) target = $region20
        $region19: #{tpu_custom_call.1} parent=15 // pred_region
          %s135 = sand.u32 %s41, 1
          %s136 = scalar_lea.sflag [#allocation3], %s135
          %s137 = sand.u32 %s41, 1
          %s138 = smul.addr %s137, 8
          %s139 = scalar_lea.vmem [#allocation2], %s138
          %s140 = smul.u32 2, %s25
          %142 = vsyncadd %s136, 0
          %s143 = smul.addr %s24, 2
          %s144 = sadd.s32 %s140, %s143
          %s145 = smul.addr %s144, 4
          %s146 = scalar_lea.hbm %s0, %s145
          %s148 = sshll.u32 %s146, 4
          %s149 = int_to_ptr.hbm [resolvable:$true] %s148
          %s150 = sshll.u32 %s139, 4
          %s151 = int_to_ptr.vmem [resolvable:$true] %s150
          %153 = dma.hbm_to_vmem [thread:$0]  %s149, 128, %s151, %s136
        $region20: #{tpu_custom_call.1} parent=15 // pred_fallthru
          _
        // Predicated region
        $region21: #{tpu_custom_call.1} parent=15 // pred_check
          %p154 = pneg %p79
        $region22: #{tpu_custom_call.1} parent=15 // pred_check_branch
          %156 = sbr.rel (%p154) target = $region24
        $region23: #{tpu_custom_call.1} parent=15 // pred_region
          %s157 = sand.u32 %s69, 1
          %s158 = scalar_lea.sflag [#allocation6], %s157
          %s159 = sand.u32 %s69, 1
          %s160 = smul.addr %s159, 8
          %s161 = scalar_lea.vmem [#allocation5], %s160
          %s162 = smul.u32 2, %s25
          %164 = vsyncadd %s158, 0
          %s165 = smul.addr %s24, 2
          %s166 = sadd.s32 %s162, %s165
          %s167 = smul.addr %s166, 4
          %s168 = scalar_lea.hbm %s1, %s167
          %s170 = sshll.u32 %s168, 4
          %s171 = int_to_ptr.hbm [resolvable:$true] %s170
          %s172 = sshll.u32 %s161, 4
          %s173 = int_to_ptr.vmem [resolvable:$true] %s172
          %175 = dma.hbm_to_vmem [thread:$0]  %s171, 128, %s173, %s158
        $region24: #{tpu_custom_call.1} parent=15 // pred_fallthru
          _
      $region16: #{tpu_custom_call.1} parent=5 // pred_fallthru
        _
      %p176 = scmp.le.s32.totalorder 1, %s17
      %p177 = scmp.lt.s32.totalorder %s17, 3
      %p178 = pnand %p176, %p177
      %p179 = pneg %p178
      // Predicated region
      $region25: #{tpu_custom_call.1} parent=5 // pred_check
        _
      $region26: #{tpu_custom_call.1} parent=5 // pred_check_branch
        %181 = sbr.rel (%p178) target = $region28
      $region27: #{tpu_custom_call.1} parent=5 // pred_region
        %s182 = ssub.s32 %s17, 1
        %s183 = sand.u32 %s44, 1
        %s184 = scalar_lea.sflag [#allocation3], %s183
        %s185 = sand.u32 %s44, 1
        %s186 = smul.addr %s185, 8
        %s187 = scalar_lea.vmem [#allocation2], %s186
        // Predicated region
        $region29: #{tpu_custom_call.1} parent=27 // pred_check
          %p188 = pneg %p57
        $region30: #{tpu_custom_call.1} parent=27 // pred_check_branch
          %190 = sbr.rel (%p188) target = $region32
        $region31: #{tpu_custom_call.1} parent=27 // pred_region
          %192 = dma.done %s184, 128
        $region32: #{tpu_custom_call.1} parent=27 // pred_fallthru
          _
        %s193 = sand.u32 %s72, 1
        %s194 = scalar_lea.sflag [#allocation6], %s193
        %s195 = sand.u32 %s72, 1
        %s196 = smul.addr %s195, 8
        %s197 = scalar_lea.vmem [#allocation5], %s196
        // Predicated region
        $region33: #{tpu_custom_call.1} parent=27 // pred_check
          %p198 = pneg %p85
        $region34: #{tpu_custom_call.1} parent=27 // pred_check_branch
          %200 = sbr.rel (%p198) target = $region36
        $region35: #{tpu_custom_call.1} parent=27 // pred_region
          %202 = dma.done %s194, 128
        $region36: #{tpu_custom_call.1} parent=27 // pred_fallthru
          _
        %s203 = sand.u32 %s44, 1
        %s204 = scalar_lea.sflag [#allocation3], %s203
        %s205 = sand.u32 %s44, 1
        %s206 = smul.addr %s205, 8
        %s207 = scalar_lea.vmem [#allocation2], %s206
        %p208 = pneg %p57
        %p209 = pneg %p54
        %s210 = sand.u32 %s72, 1
        %s211 = scalar_lea.sflag [#allocation6], %s210
        %s212 = sand.u32 %s72, 1
        %s213 = smul.addr %s212, 8
        %s214 = scalar_lea.vmem [#allocation5], %s213
        %p215 = pneg %p85
        %p216 = pneg %p82
        %p217 = pneg %p113
        %p218 = pneg %p110
        %s219 = sand.u32 %s100, 1
        %s220 = scalar_lea.sflag [#allocation4], %s219
        %s221 = sand.u32 %s100, 1
        %s222 = smul.addr %s221, 2
        %s223 = scalar_lea.vmem [#allocation7], %s222
        %s224 = smul.u32 2, %s27
        %s225 = smul.u32 2, %s27
        %s226 = smul.u32 2, %s27
        %v227 = vld [vmem:[%s187] ss:$4 sm:$0x3]
        %v228 = vld [vmem:[%s197] ss:$4 sm:$0x3]
        %v229 = vsub.f32 %v227, %v228
        %v230 = vmul.f32 %v229, %v229
        %s231 = scalar_lea.vmem %s187, 1 [#allocation2]
        %v232 = vld [vmem:[%s231] ss:$4 sm:$0x3]
        %s233 = scalar_lea.vmem %s197, 1 [#allocation5]
        %v234 = vld [vmem:[%s233] ss:$4 sm:$0x3]
        %v235 = vsub.f32 %v232, %v234
        %v236 = vmul.f32 %v235, %v235
        %v237 = vadd.f32 %v230, %v236
        %s238 = scalar_lea.vmem %s187, 2 [#allocation2]
        %v239 = vld [vmem:[%s238] ss:$4 sm:$0x3]
        %s240 = scalar_lea.vmem %s197, 2 [#allocation5]
        %v241 = vld [vmem:[%s240] ss:$4 sm:$0x3]
        %v242 = vsub.f32 %v239, %v241
        %v243 = vmul.f32 %v242, %v242
        %v244 = vadd.f32 %v237, %v243
        %s245 = scalar_lea.vmem %s187, 3 [#allocation2]
        %v246 = vld [vmem:[%s245] ss:$4 sm:$0x3]
        %s247 = scalar_lea.vmem %s197, 3 [#allocation5]
        %v248 = vld [vmem:[%s247] ss:$4 sm:$0x3]
        %v249 = vsub.f32 %v246, %v248
        %v250 = vmul.f32 %v249, %v249
        %v251 = vadd.f32 %v244, %v250
        %vm252 = vcmp.gt.f32.partialorder %v251, 0.00062500004
        %v253 = vsel %vm252, 1, 0
        %v254 = vcvt.s32.f32 %v253
        %v255 = vlaneseq
        %vm256 = vcmp.ge.s32.totalorder %v255, 0
        %vm257 = vcmp.lt.s32.totalorder %v255, 256
        %vm258 = vmand %vm256, %vm257
        %259 = vst.msk [vmem:[%s223] sm:$0x3] %vm258, %v254
        %s260 = sand.u32 %s100, 1
        %s261 = scalar_lea.sflag [#allocation4], %s260
        %s262 = sand.u32 %s100, 1
        %s263 = smul.addr %s262, 2
        %s264 = scalar_lea.vmem [#allocation7], %s263
        // Predicated region
        $region37: #{tpu_custom_call.1} parent=27 // pred_check
          %p265 = pneg %p110
        $region38: #{tpu_custom_call.1} parent=27 // pred_check_branch
          %267 = sbr.rel (%p265) target = $region40
        $region39: #{tpu_custom_call.1} parent=27 // pred_region
          %s268 = smul.u32 2, %s27
          %270 = vsyncadd %s261, 0
          %s271 = smul.addr %s26, 2
          %s272 = sadd.s32 %s268, %s271
          %s273 = scalar_lea.hbm %s2, %s272
          %s275 = sshll.u32 %s264, 4
          %s276 = int_to_ptr.vmem [resolvable:$true] %s275
          %s277 = sshll.u32 %s273, 4
          %s278 = int_to_ptr.hbm [resolvable:$true] %s277
          %280 = dma.vmem_to_hbm [thread:$0]  %s276, 32, %s278, %s261
        $region40: #{tpu_custom_call.1} parent=27 // pred_fallthru
          _
      $region28: #{tpu_custom_call.1} parent=5 // pred_fallthru
        _
      %p281 = scmp.le.s32.totalorder 2, %s17
      // Predicated region
      $region41: #{tpu_custom_call.1} parent=5 // pred_check
        %p282 = pneg %p281
      $region42: #{tpu_custom_call.1} parent=5 // pred_check_branch
        %284 = sbr.rel (%p282) target = $region44
      $region43: #{tpu_custom_call.1} parent=5 // pred_region
        %s285 = ssub.s32 %s17, 2
        // Predicated region
        $region45: #{tpu_custom_call.1} parent=43 // pred_check
          %p286 = pneg %p116
        $region46: #{tpu_custom_call.1} parent=43 // pred_check_branch
          %288 = sbr.rel (%p286) target = $region48
        $region47: #{tpu_custom_call.1} parent=43 // pred_region
          %s289 = sand.u32 %s101, 1
          %s290 = scalar_lea.sflag [#allocation4], %s289
          %s291 = sand.u32 %s101, 1
          %s292 = smul.addr %s291, 2
          %s293 = scalar_lea.vmem [#allocation7], %s292
          %295 = dma.done %s290, 32
        $region48: #{tpu_custom_call.1} parent=43 // pred_fallthru
          _
      $region44: #{tpu_custom_call.1} parent=5 // pred_fallthru
        _
    $region6: #{tpu_custom_call.1} parent=1 // loop_footer
      %s21 = sadd.s32 1, %s17
    $region7: #{tpu_custom_call.1} parent=1 // loop_footer_branch
      %16 = sbr.rel target = $region3
    $region8: #{tpu_custom_call.1} parent=1 // loop_exit
      _
    %296 = vsyncpa [#allocation3], 1
    %s297 = scalar_lea.sflag [#allocation3], 1
    %298 = vsyncpa %s297, 1
    %299 = vsyncpa [#allocation6], 1
    %s300 = scalar_lea.sflag [#allocation6], 1
    %301 = vsyncpa %s300, 1
    %302 = vsyncpa [#allocation4], 1
    %s303 = scalar_lea.sflag [#allocation4], 1
    %304 = vsyncpa %s303, 1

</llo_original>
